<compile_context>
chip_gen: v7x
topology: tpu7x:2x2x1
jax: 0.10.0
libtpu: 0.0.40
codegen_flags: <defaults>
</compile_context>

<pallas_src>
import jax
import jax.numpy as jnp
import numpy as np
from jax.experimental import pallas as pl
from jax.experimental.pallas import tpu as pltpu


def _cross_attn_kernel(x1_ref, x2_ref, wq_ref, bq_ref, wk_ref, bk_ref, wv_ref, bv_ref,
                       o_ref):
    # x1_ref: (bt*S1, D_in) bf16, x2_ref: (bt*S2, D_in) bf16 — one batch *chunk* per step.
    bt, s1, od_p = o_ref.shape
    s2 = x2_ref.shape[0] // bt
    kq_p = wq_ref.shape[1]

    x1 = x1_ref[...]
    x2 = x2_ref[...]

    # Projections: bf16 operands, f32 accumulation. Scale is folded into wq/bq.
    q = jnp.dot(x1, wq_ref[...], preferred_element_type=jnp.float32) + bq_ref[...]
    k = jnp.dot(x2, wk_ref[...], preferred_element_type=jnp.float32) + bk_ref[...]
    v = jnp.dot(x2, wv_ref[...], preferred_element_type=jnp.float32) + bv_ref[...]

    # Split only the leading (row) dim while still f32, then cast to bf16 for the MXU.
    q = q.reshape(bt, s1, kq_p).astype(jnp.bfloat16)
    k = k.reshape(bt, s2, kq_p).astype(jnp.bfloat16)
    v = v.reshape(bt, s2, od_p).astype(jnp.bfloat16)

    # Attention scores: contract on last axes (no explicit K transpose), bf16 -> f32 acc.
    scores = jnp.einsum("bqd,bkd->bqk", q, k, preferred_element_type=jnp.float32)

    # Numerically stable softmax; normalization via EUP approx reciprocal.
    m = jnp.max(scores, axis=-1, keepdims=True)
    e = jnp.exp(scores - m)
    denom = jnp.sum(e, axis=-1, keepdims=True)
    attn = (e * pl.reciprocal(denom, approx=True)).astype(jnp.bfloat16)

    out = jnp.einsum("bqk,bkd->bqd", attn, v, preferred_element_type=jnp.float32)
    o_ref[...] = out.astype(o_ref.dtype)


def _round_up(x, m):
    return ((x + m - 1) // m) * m


def _pad_cols(a, total):
    pad = total - a.shape[-1]
    return a if pad == 0 else jnp.pad(a, ((0, 0), (0, pad)))


def _vmem_capacity_bytes():
    try:
        return int(pltpu.get_tpu_info().vmem_capacity_bytes)
    except Exception:
        return 64 * 1024 * 1024  # conservative (v7x per-TC physical VMEM)


def _pick_block_b(B, S1, S2, D_in, kq_p, od_p, vmem_limit):
    """Batch-chunk size: amortize the ~0.35us per-step pipeline overhead, stay inside the
    scoped VMEM limit, keep >=2 grid steps per TensorCore (v7x), and divide B exactly."""
    # Per-batch-element live bytes (conservative: counts f32 + bf16 copies of q/k/v,
    # scores/e/attn, and double-buffered activation/output blocks).
    act = 2 * 2 * (S1 + S2) * D_in                       # bf16 input blocks, double-buffered
    outb = 2 * 4 * S1 * od_p                             # f32 output block, double-buffered
    proj = (S1 * kq_p + S2 * kq_p + S2 * od_p) * (4 + 2)  # q/k/v: f32 + bf16 copies
    attn = 4 * S1 * S2 * 4                               # scores, e, attn (+ slack)
    per_b = act + outb + proj + attn
    fixed = 2 * 2 * D_in * (2 * kq_p + od_p) + 8 * (2 * kq_p + od_p)  # resident weights/biases
    budget = vmem_limit // 3
    cap = max(1, (budget - fixed) // max(per_b, 1))
    cap = min(cap, max(1, B // 4))  # >= 4 steps when B allows -> 2 steps per v7x TC
    for bb in range(min(cap, B), 0, -1):
        if B % bb == 0 and (bb * S1) % 8 == 0 and (bb * S2) % 8 == 0:
            return bb
    return B  # full-batch block always satisfies the (8,128) tiling constraint


def cross_attention(x_1, x_2, params, *, block_b=None, compute_dtype=jnp.bfloat16):
    """params: dict with W_q, b_q, W_k, b_k, W_v, b_v in PyTorch Linear layout
    (W: (out_features, in_features), b: (out_features,))."""
    B, S1, D_in = x_1.shape
    _, S2, _ = x_2.shape
    kq_dim = params["W_q"].shape[0]
    out_dim = params["W_v"].shape[0]
    scale = 1.0 / np.sqrt(kq_dim)

    # Lane-dense padded dims (zero columns: contribute 0 to QK^T, sliced off the output).
    kq_p = _round_up(kq_dim, 128)
    od_p = _round_up(out_dim, 128)

    f32 = jnp.float32
    wq = _pad_cols(jnp.asarray(params["W_q"], f32).T * scale, kq_p).astype(compute_dtype)
    wk = _pad_cols(jnp.asarray(params["W_k"], f32).T, kq_p).astype(compute_dtype)
    wv = _pad_cols(jnp.asarray(params["W_v"], f32).T, od_p).astype(compute_dtype)
    bq = _pad_cols((jnp.asarray(params["b_q"], f32) * scale).reshape(1, -1), kq_p)
    bk = _pad_cols(jnp.asarray(params["b_k"], f32).reshape(1, -1), kq_p)
    bv = _pad_cols(jnp.asarray(params["b_v"], f32).reshape(1, -1), od_p)

    # Wrapper-side flatten (metadata-only on HBM) + bf16 cast: kernel gets 2-D tiles.
    x1f = jnp.asarray(x_1, compute_dtype).reshape(B * S1, D_in)
    x2f = jnp.asarray(x_2, compute_dtype).reshape(B * S2, D_in)

    vmem_limit = int(min(_vmem_capacity_bytes() // 2, 48 * 1024 * 1024))
    if block_b is None:
        block_b = _pick_block_b(B, S1, S2, D_in, kq_p, od_p, vmem_limit)
    block_b = max(1, min(int(block_b), B))
    while B % block_b != 0:  # never leave a ragged last block
        block_b -= 1
    grid = (B // block_b,)

    whole = lambda b: (0, 0)  # weights/biases: constant index map -> VMEM-resident

    out_padded = pl.pallas_call(
        _cross_attn_kernel,
        out_shape=jax.ShapeDtypeStruct((B, S1, od_p), jnp.float32),
        grid_spec=pl.GridSpec(
            grid=grid,
            in_specs=[
                pl.BlockSpec((block_b * S1, D_in), lambda b: (b, 0)),   # x_1 chunk (2-D)
                pl.BlockSpec((block_b * S2, D_in), lambda b: (b, 0)),   # x_2 chunk (2-D)
                pl.BlockSpec((D_in, kq_p), whole),                      # W_q^T * scale (padded)
                pl.BlockSpec((1, kq_p), whole),                         # b_q * scale
                pl.BlockSpec((D_in, kq_p), whole),                      # W_k^T
                pl.BlockSpec((1, kq_p), whole),                         # b_k
                pl.BlockSpec((D_in, od_p), whole),                      # W_v^T
                pl.BlockSpec((1, od_p), whole),                         # b_v
            ],
            out_specs=pl.BlockSpec((block_b, S1, od_p), lambda b: (b, 0, 0)),
        ),
        compiler_params=pltpu.CompilerParams(
            dimension_semantics=("parallel",),      # megacore / v7x 2-TC sharding
            vmem_limit_bytes=vmem_limit),
    )(x1f, x2f, wq, bq, wk, bk, wv, bv)

    return out_padded if od_p == out_dim else out_padded[:, :, :out_dim]


def _init_params(key, input_dim, kq_dim, output_dim):
    """Deterministic init mimicking PyTorch nn.Linear (uniform +/- 1/sqrt(fan_in))."""
    ks = jax.random.split(key, 6)
    bound = 1.0 / np.sqrt(input_dim)
    u = lambda k, shape: jax.random.uniform(k, shape, jnp.float32, -bound, bound)
    return {
        "W_q": u(ks[0], (kq_dim, input_dim)),     "b_q": u(ks[1], (kq_dim,)),
        "W_k": u(ks[2], (kq_dim, input_dim)),     "b_k": u(ks[3], (kq_dim,)),
        "W_v": u(ks[4], (output_dim, input_dim)), "b_v": u(ks[5], (output_dim,)),
    }


def _reference(x_1, x_2, params, compute_dtype=jnp.bfloat16):
    """Mixed-precision reference mirroring the kernel's bf16 operand quantization.
    Same module math: Q=W_q x1, K=W_k x2, V=W_v x2, softmax(QK^T/sqrt(kq)) V."""
    f32 = jnp.float32
    hi = jax.lax.Precision.HIGHEST
    kq_dim = params["W_q"].shape[0]
    scale = 1.0 / np.sqrt(kq_dim)
    quant = lambda a: jnp.asarray(a, compute_dtype).astype(f32)

    x1 = quant(x_1)
    x2 = quant(x_2)
    wq = quant(jnp.asarray(params["W_q"], f32).T * scale)
    wk = quant(jnp.asarray(params["W_k"], f32).T)
    wv = quant(jnp.asarray(params["W_v"], f32).T)

    q = quant(jnp.einsum("bsd,de->bse", x1, wq, precision=hi) + params["b_q"] * scale)
    k = quant(jnp.einsum("bsd,de->bse", x2, wk, precision=hi) + params["b_k"])
    v = quant(jnp.einsum("bsd,de->bse", x2, wv, precision=hi) + params["b_v"])
    scores = jnp.einsum("bqe,bke->bqk", q, k, precision=hi)
    w = jax.nn.softmax(scores, axis=-1)
    return jnp.einsum("bqk,bkd->bqd", quant(w), v, precision=hi)


if __name__ == "__main__":
    B, S1, S2 = 4, 8, 8
    input_dim, kq_dim, output_dim = 32, 16, 32

    key = jax.random.PRNGKey(0)
    k_x1, k_x2, k_p = jax.random.split(key, 3)
    x_1 = jax.random.normal(k_x1, (B, S1, input_dim), jnp.float32)
    x_2 = jax.random.normal(k_x2, (B, S2, input_dim), jnp.float32)
    params = _init_params(k_p, input_dim, kq_dim, output_dim)

    out = jax.block_until_ready(cross_attention(x_1, x_2, params))

    ref = _reference(x_1, x_2, params)
    np.testing.assert_allclose(np.asarray(out), np.asarray(ref), rtol=1e-2, atol=1e-2)
    print("KERNEL_OK")
</pallas_src>

<mosaic_0001>
module attributes {stable_mosaic.version = 11 : i64} {
  func.func @_cross_attn_kernel(%arg0: i32, %arg1: memref<8x32xbf16, #tpu.memory_space<vmem>>, %arg2: memref<8x32xbf16, #tpu.memory_space<vmem>>, %arg3: memref<32x128xbf16, #tpu.memory_space<vmem>>, %arg4: memref<1x128xf32, #tpu.memory_space<vmem>>, %arg5: memref<32x128xbf16, #tpu.memory_space<vmem>>, %arg6: memref<1x128xf32, #tpu.memory_space<vmem>>, %arg7: memref<32x128xbf16, #tpu.memory_space<vmem>>, %arg8: memref<1x128xf32, #tpu.memory_space<vmem>>, %arg9: memref<1x8x128xf32, #tpu.memory_space<vmem>>) attributes {dimension_semantics = [#tpu.dimension_semantics<parallel>], iteration_bounds = array<i64: 4>, scalar_prefetch = 0 : i64, scratch_operands = 0 : i64, tpu.core_type = #tpu.core_type<tc>, window_params = [{transform_indices = @transform_0, window_bounds = array<i64: 8, 32>}, {transform_indices = @transform_1, window_bounds = array<i64: 8, 32>}, {pipeline_mode = #tpu.pipeline_mode<synchronous>, transform_indices = @transform_2, window_bounds = array<i64: 32, 128>}, {pipeline_mode = #tpu.pipeline_mode<synchronous>, transform_indices = @transform_3, window_bounds = array<i64: 1, 128>}, {pipeline_mode = #tpu.pipeline_mode<synchronous>, transform_indices = @transform_4, window_bounds = array<i64: 32, 128>}, {pipeline_mode = #tpu.pipeline_mode<synchronous>, transform_indices = @transform_5, window_bounds = array<i64: 1, 128>}, {pipeline_mode = #tpu.pipeline_mode<synchronous>, transform_indices = @transform_6, window_bounds = array<i64: 32, 128>}, {pipeline_mode = #tpu.pipeline_mode<synchronous>, transform_indices = @transform_7, window_bounds = array<i64: 1, 128>}, {transform_indices = @transform_8, window_bounds = array<i64: 1, 8, 128>}]} {
    %c0 = arith.constant 0 : index
    %c0_0 = arith.constant 0 : index
    %0 = vector.load %arg1[%c0, %c0_0] : memref<8x32xbf16, #tpu.memory_space<vmem>>, vector<8x32xbf16>
    %c0_1 = arith.constant 0 : index
    %c0_2 = arith.constant 0 : index
    %1 = vector.load %arg2[%c0_1, %c0_2] : memref<8x32xbf16, #tpu.memory_space<vmem>>, vector<8x32xbf16>
    %c0_3 = arith.constant 0 : index
    %c0_4 = arith.constant 0 : index
    %2 = vector.load %arg3[%c0_3, %c0_4] : memref<32x128xbf16, #tpu.memory_space<vmem>>, vector<32x128xbf16>
    %cst = arith.constant dense<0.000000e+00> : vector<8x128xf32>
    %3 = tpu.matmul %0, %2, %cst {dimension_numbers = #tpu.dot_dimension_numbers<[1], [0], [0], [1], [0, 0, 1, 1], [], []>} : vector<8x32xbf16>, vector<32x128xbf16>, vector<8x128xf32> -> vector<8x128xf32>
    %c0_5 = arith.constant 0 : index
    %c0_6 = arith.constant 0 : index
    %4 = vector.load %arg4[%c0_5, %c0_6] : memref<1x128xf32, #tpu.memory_space<vmem>>, vector<1x128xf32>
    %5 = vector.broadcast %4 : vector<1x128xf32> to vector<8x128xf32>
    %6 = arith.addf %3, %5 : vector<8x128xf32>
    %c0_7 = arith.constant 0 : index
    %c0_8 = arith.constant 0 : index
    %7 = vector.load %arg5[%c0_7, %c0_8] : memref<32x128xbf16, #tpu.memory_space<vmem>>, vector<32x128xbf16>
    %cst_9 = arith.constant dense<0.000000e+00> : vector<8x128xf32>
    %8 = tpu.matmul %1, %7, %cst_9 {dimension_numbers = #tpu.dot_dimension_numbers<[1], [0], [0], [1], [0, 0, 1, 1], [], []>} : vector<8x32xbf16>, vector<32x128xbf16>, vector<8x128xf32> -> vector<8x128xf32>
    %c0_10 = arith.constant 0 : index
    %c0_11 = arith.constant 0 : index
    %9 = vector.load %arg6[%c0_10, %c0_11] : memref<1x128xf32, #tpu.memory_space<vmem>>, vector<1x128xf32>
    %10 = vector.broadcast %9 : vector<1x128xf32> to vector<8x128xf32>
    %11 = arith.addf %8, %10 : vector<8x128xf32>
    %c0_12 = arith.constant 0 : index
    %c0_13 = arith.constant 0 : index
    %12 = vector.load %arg7[%c0_12, %c0_13] : memref<32x128xbf16, #tpu.memory_space<vmem>>, vector<32x128xbf16>
    %cst_14 = arith.constant dense<0.000000e+00> : vector<8x128xf32>
    %13 = tpu.matmul %1, %12, %cst_14 {dimension_numbers = #tpu.dot_dimension_numbers<[1], [0], [0], [1], [0, 0, 1, 1], [], []>} : vector<8x32xbf16>, vector<32x128xbf16>, vector<8x128xf32> -> vector<8x128xf32>
    %c0_15 = arith.constant 0 : index
    %c0_16 = arith.constant 0 : index
    %14 = vector.load %arg8[%c0_15, %c0_16] : memref<1x128xf32, #tpu.memory_space<vmem>>, vector<1x128xf32>
    %15 = vector.broadcast %14 : vector<1x128xf32> to vector<8x128xf32>
    %16 = arith.addf %13, %15 : vector<8x128xf32>
    %17 = vector.shape_cast %6 : vector<8x128xf32> to vector<1x8x128xf32>
    %18 = arith.truncf %17 : vector<1x8x128xf32> to vector<1x8x128xbf16>
    %19 = vector.shape_cast %11 : vector<8x128xf32> to vector<1x8x128xf32>
    %20 = arith.truncf %19 : vector<1x8x128xf32> to vector<1x8x128xbf16>
    %21 = vector.shape_cast %16 : vector<8x128xf32> to vector<1x8x128xf32>
    %22 = arith.truncf %21 : vector<1x8x128xf32> to vector<1x8x128xbf16>
    "tpu.trace_start"() <{level = 10 : i32, message = "bqd,bkd->bqk"}> : () -> ()
    %cst_17 = arith.constant dense<0.000000e+00> : vector<1x8x8xf32>
    %23 = tpu.matmul %18, %20, %cst_17 {dimension_numbers = #tpu.dot_dimension_numbers<[2], [2], [1], [1], [0, 0, 0, 1, 1, 1], [0], [0]>} : vector<1x8x128xbf16>, vector<1x8x128xbf16>, vector<1x8x8xf32> -> vector<1x8x8xf32>
    "tpu.trace_stop"() : () -> ()
    %cst_18 = arith.constant dense<0xFF800000> : vector<1x8xf32>
    %24 = vector.multi_reduction <maximumf>, %23, %cst_18 [2] : vector<1x8x8xf32> to vector<1x8xf32>
    %25 = vector.shape_cast %24 : vector<1x8xf32> to vector<1x8x1xf32>
    %26 = vector.broadcast %25 : vector<1x8x1xf32> to vector<1x8x8xf32>
    %27 = arith.subf %23, %26 : vector<1x8x8xf32>
    %28 = math.exp %27 : vector<1x8x8xf32>
    %cst_19 = arith.constant dense<0.000000e+00> : vector<1x8xf32>
    %29 = vector.multi_reduction <add>, %28, %cst_19 [2] : vector<1x8x8xf32> to vector<1x8xf32>
    %30 = vector.shape_cast %29 : vector<1x8xf32> to vector<1x8x1xf32>
    %31 = tpu.reciprocal %30 {approx = true} : vector<1x8x1xf32> -> vector<1x8x1xf32>
    %32 = vector.broadcast %31 : vector<1x8x1xf32> to vector<1x8x8xf32>
    %33 = arith.mulf %28, %32 : vector<1x8x8xf32>
    %34 = arith.truncf %33 : vector<1x8x8xf32> to vector<1x8x8xbf16>
    "tpu.trace_start"() <{level = 10 : i32, message = "bqk,bkd->bqd"}> : () -> ()
    %cst_20 = arith.constant dense<0.000000e+00> : vector<1x8x128xf32>
    %35 = tpu.matmul %34, %22, %cst_20 {dimension_numbers = #tpu.dot_dimension_numbers<[2], [1], [1], [2], [0, 0, 0, 1, 1, 2], [0], [0]>} : vector<1x8x8xbf16>, vector<1x8x128xbf16>, vector<1x8x128xf32> -> vector<1x8x128xf32>
    "tpu.trace_stop"() : () -> ()
    %c0_21 = arith.constant 0 : index
    %c0_22 = arith.constant 0 : index
    %c0_23 = arith.constant 0 : index
    %36 = vector.load %arg9[%c0_21, %c0_22, %c0_23] : memref<1x8x128xf32, #tpu.memory_space<vmem>>, vector<1x8x128xf32>
    tpu.vector_store %arg9[%c0_21, %c0_22, %c0_23], %35 {strides = array<i32>} : memref<1x8x128xf32, #tpu.memory_space<vmem>>, vector<1x8x128xf32>,
    return
  }
  func.func @transform_0(%arg0: i32) -> (i32, i32) {
    %c0_i32 = arith.constant 0 : i32
    %c0_i32_0 = arith.constant 0 : i32
    return %arg0, %c0_i32 : i32, i32
  }
  func.func @transform_1(%arg0: i32) -> (i32, i32) {
    %c0_i32 = arith.constant 0 : i32
    %c0_i32_0 = arith.constant 0 : i32
    return %arg0, %c0_i32 : i32, i32
  }
  func.func @transform_2(%arg0: i32) -> (i32, i32) {
    %c0_i32 = arith.constant 0 : i32
    %c0_i32_0 = arith.constant 0 : i32
    %c0_i32_1 = arith.constant 0 : i32
    return %c0_i32, %c0_i32_0 : i32, i32
  }
  func.func @transform_3(%arg0: i32) -> (i32, i32) {
    %c0_i32 = arith.constant 0 : i32
    %c0_i32_0 = arith.constant 0 : i32
    %c0_i32_1 = arith.constant 0 : i32
    return %c0_i32, %c0_i32_0 : i32, i32
  }
  func.func @transform_4(%arg0: i32) -> (i32, i32) {
    %c0_i32 = arith.constant 0 : i32
    %c0_i32_0 = arith.constant 0 : i32
    %c0_i32_1 = arith.constant 0 : i32
    return %c0_i32, %c0_i32_0 : i32, i32
  }
  func.func @transform_5(%arg0: i32) -> (i32, i32) {
    %c0_i32 = arith.constant 0 : i32
    %c0_i32_0 = arith.constant 0 : i32
    %c0_i32_1 = arith.constant 0 : i32
    return %c0_i32, %c0_i32_0 : i32, i32
  }
  func.func @transform_6(%arg0: i32) -> (i32, i32) {
    %c0_i32 = arith.constant 0 : i32
    %c0_i32_0 = arith.constant 0 : i32
    %c0_i32_1 = arith.constant 0 : i32
    return %c0_i32, %c0_i32_0 : i32, i32
  }
  func.func @transform_7(%arg0: i32) -> (i32, i32) {
    %c0_i32 = arith.constant 0 : i32
    %c0_i32_0 = arith.constant 0 : i32
    %c0_i32_1 = arith.constant 0 : i32
    return %c0_i32, %c0_i32_0 : i32, i32
  }
  func.func @transform_8(%arg0: i32) -> (i32, i32, i32) {
    %c0_i32 = arith.constant 0 : i32
    %c0_i32_0 = arith.constant 0 : i32
    %c0_i32_1 = arith.constant 0 : i32
    return %arg0, %c0_i32, %c0_i32_0 : i32, i32, i32
  }
}

</mosaic_0001>

<llo_original>
// kernel: tpu_custom_call.1
$region0: #{tpu_custom_call.1}
  #allocation0 [shape = 'u32[]', space=smem, size = 0x4, offset = 0x4, fixed_abs, tag = 'smem constant byte address 0x4 - core index']
  #allocation1 [shape = 'u32[144,128]{1,0:T(1,128)}', space=vmem, size = 0x12000, scoped, tag = 'internal scratch']
  %s0 = inlined_call_operand.hbm [shape: bf16[32,32], index: 0, kind: input, shape index: {}]
  %s1 = inlined_call_operand.hbm [shape: bf16[32,32], index: 1, kind: input, shape index: {}]
  %s2 = inlined_call_operand.hbm [shape: bf16[32,128], index: 2, kind: input, shape index: {}]
  %s3 = inlined_call_operand.vmem [shape: f32[1,128], index: 3, kind: input, shape index: {}]
  %s4 = inlined_call_operand.hbm [shape: bf16[32,128], index: 4, kind: input, shape index: {}]
  %s5 = inlined_call_operand.vmem [shape: f32[1,128], index: 5, kind: input, shape index: {}]
  %s6 = inlined_call_operand.vmem [shape: bf16[32,128], index: 6, kind: input, shape index: {}]
  %s7 = inlined_call_operand.vmem [shape: f32[1,128], index: 7, kind: input, shape index: {}]
  %s8 = inlined_call_operand.hbm [shape: f32[4,8,128], index: 8, kind: output, shape index: {}]
  %s9 = sld [smem:[#allocation0]]
  $region81: #{tpu_custom_call.1} parent=0
    _
  %s11 = ssub.s32 1, %s9
  %s12 = scalar_select 0, %s11, %s9
  $region1: #{tpu_custom_call.1} parent=0
    #allocation2 [shape = 'u8[4096]{0}', space=vmem, size = 0x1000, scoped, tag = 'input window, operand 0']
    #allocation3 [shape = 's32[2]{0}', space=sflag, size = 0x8, scoped, tag = 'scoped memory for tpu_custom_call.1']
    #allocation4 [shape = 's32[2]{0}', space=sflag, size = 0x8, scoped, tag = 'scoped memory for tpu_custom_call.1']
    #allocation5 [shape = 'u8[4096]{0}', space=vmem, size = 0x1000, scoped, tag = 'input window, operand 1']
    #allocation6 [shape = 's32[2]{0}', space=sflag, size = 0x8, scoped, tag = 'scoped memory for tpu_custom_call.1']
    #allocation7 [shape = 'u8[8192]{0}', space=vmem, size = 0x2000, scoped, tag = 'input window, operand 2, single buffered']
    #allocation8 [shape = 'u8[8192]{0}', space=vmem, size = 0x2000, scoped, tag = 'input window, operand 4, single buffered']
    #allocation9 [shape = 's32[1]{0}', space=sflag, size = 0x4, scoped, tag = 'scoped memory for tpu_custom_call.1']
    #allocation10 [shape = 'u8[8192]{0}', space=vmem, size = 0x2000, scoped, tag = 'output window, operand 0']
    %13 = vsyncpa [#allocation3], 0
    %s14 = scalar_lea.sflag [#allocation3], 1
    %15 = vsyncpa %s14, 0
    %16 = vsyncpa [#allocation6], 0
    %s17 = scalar_lea.sflag [#allocation6], 1
    %18 = vsyncpa %s17, 0
    %19 = vsyncpa [#allocation9], 0
    %20 = vsyncpa [#allocation4], 0
    %s21 = scalar_lea.sflag [#allocation4], 1
    %22 = vsyncpa %s21, 0
    loop: start=0, step=1, limit=6
    $region2: #{tpu_custom_call.1} parent=1 // loop_pre_header
      _
    $region3: #{tpu_custom_call.1} parent=1 // loop_header
      %s24 = sphi 0, %s28
      %p25 = scmp.ge.s32.totalorder %s24, 6
      %s34 = sphi 0, %s36
      %s37 = sphi 0, %s34
      %s38 = sphi 0, %s37
      %s54 = sphi 0, %s38
      %s60 = sphi 0, %s62
      %s63 = sphi 0, %s60
      %s64 = sphi 0, %s63
      %s80 = sphi 0, %s64
      %s84 = sphi 0, %s84
      %s86 = sphi 0, %s84
      %s87 = sphi 0, %s86
      %s101 = sphi 0, %s87
      %s105 = sphi 0, %s105
      %s107 = sphi 0, %s105
      %s108 = sphi 0, %s107
      %s122 = sphi 0, %s108
      %s126 = sphi 0, %s126
      %s128 = sphi 0, %s126
      %s129 = sphi 0, %s128
      %s143 = sphi 0, %s129
      %s147 = sphi 0, %s147
      %s149 = sphi 0, %s147
      %s150 = sphi 0, %s149
      %s164 = sphi 0, %s150
      %s168 = sphi 0, %s168
      %s170 = sphi 0, %s168
      %s171 = sphi 0, %s170
      %s185 = sphi 0, %s171
      %s189 = sphi 0, %s189
      %s191 = sphi 0, %s189
      %s192 = sphi 0, %s191
      %s206 = sphi 0, %s192
      %s212 = sphi 0, %s214
      %s215 = sphi 0, %s212
      %s216 = sphi 0, %s215
      %s232 = sphi 0, %s216
    $region4: #{tpu_custom_call.1} parent=1 // loop_header_branch
      %27 = sbr.rel (%p25) target = $region8
    $region5: #{tpu_custom_call.1} parent=1 // loop_body
      %s29 = ssub.s32 %s24, 1
      %s30 = ssub.s32 %s24, 2
      %s31 = sadd.s32 %s24, 1
      %s32 = ssub.s32 %s24, %s31
      %p33 = scmp.eq.s32.totalorder %s32, 0
      %s35 = sadd.s32 %s34, 1
      %s36 = scalar_select %p33, %s34, %s35
      %p39 = pneg %p33
      %p40 = scmp.eq.s32.totalorder %s24, 3
      %p41 = por %p39, %p40
      %p42 = scmp.ne.s32.totalorder %s34, %s37
      %p43 = scmp.eq.s32.totalorder %s24, 0
      %p44 = por %p42, %p43
      %p45 = scmp.ne.s32.totalorder %s34, %s37
      %p46 = scmp.eq.s32.totalorder %s29, 3
      %p47 = por %p45, %p46
      %p48 = scmp.ne.s32.totalorder %s37, %s38
      %p49 = scmp.eq.s32.totalorder %s29, 0
      %p50 = por %p48, %p49
      %p51 = scmp.ne.s32.totalorder %s37, %s38
      %p52 = scmp.eq.s32.totalorder %s30, 3
      %p53 = por %p51, %p52
      %p55 = scmp.ne.s32.totalorder %s38, %s54
      %p56 = scmp.eq.s32.totalorder %s30, 0
      %p57 = por %p55, %p56
      %s58 = ssub.s32 %s24, %s31
      %p59 = scmp.eq.s32.totalorder %s58, 0
      %s61 = sadd.s32 %s60, 1
      %s62 = scalar_select %p59, %s60, %s61
      %p65 = pneg %p59
      %p66 = scmp.eq.s32.totalorder %s24, 3
      %p67 = por %p65, %p66
      %p68 = scmp.ne.s32.totalorder %s60, %s63
      %p69 = scmp.eq.s32.totalorder %s24, 0
      %p70 = por %p68, %p69
      %p71 = scmp.ne.s32.totalorder %s60, %s63
      %p72 = scmp.eq.s32.totalorder %s29, 3
      %p73 = por %p71, %p72
      %p74 = scmp.ne.s32.totalorder %s63, %s64
      %p75 = scmp.eq.s32.totalorder %s29, 0
      %p76 = por %p74, %p75
      %p77 = scmp.ne.s32.totalorder %s63, %s64
      %p78 = scmp.eq.s32.totalorder %s30, 3
      %p79 = por %p77, %p78
      %p81 = scmp.ne.s32.totalorder %s64, %s80
      %p82 = scmp.eq.s32.totalorder %s30, 0
      %p83 = por %p81, %p82
      %s85 = sadd.s32 %s84, 1
      %p88 = scmp.eq.s32.totalorder %s24, 3
      %p89 = scmp.ne.s32.totalorder %s84, %s86
      %p90 = scmp.eq.s32.totalorder %s24, 0
      %p91 = por %p89, %p90
      %p92 = scmp.ne.s32.totalorder %s84, %s86
      %p93 = scmp.eq.s32.totalorder %s29, 3
      %p94 = por %p92, %p93
      %p95 = scmp.ne.s32.totalorder %s86, %s87
      %p96 = scmp.eq.s32.totalorder %s29, 0
      %p97 = por %p95, %p96
      %p98 = scmp.ne.s32.totalorder %s86, %s87
      %p99 = scmp.eq.s32.totalorder %s30, 3
      %p100 = por %p98, %p99
      %p102 = scmp.ne.s32.totalorder %s87, %s101
      %p103 = scmp.eq.s32.totalorder %s30, 0
      %p104 = por %p102, %p103
      %s106 = sadd.s32 %s105, 1
      %p109 = scmp.eq.s32.totalorder %s24, 3
      %p110 = scmp.ne.s32.totalorder %s105, %s107
      %p111 = scmp.eq.s32.totalorder %s24, 0
      %p112 = por %p110, %p111
      %p113 = scmp.ne.s32.totalorder %s105, %s107
      %p114 = scmp.eq.s32.totalorder %s29, 3
      %p115 = por %p113, %p114
      %p116 = scmp.ne.s32.totalorder %s107, %s108
      %p117 = scmp.eq.s32.totalorder %s29, 0
      %p118 = por %p116, %p117
      %p119 = scmp.ne.s32.totalorder %s107, %s108
      %p120 = scmp.eq.s32.totalorder %s30, 3
      %p121 = por %p119, %p120
      %p123 = scmp.ne.s32.totalorder %s108, %s122
      %p124 = scmp.eq.s32.totalorder %s30, 0
      %p125 = por %p123, %p124
      %s127 = sadd.s32 %s126, 1
      %p130 = scmp.eq.s32.totalorder %s24, 3
      %p131 = scmp.ne.s32.totalorder %s126, %s128
      %p132 = scmp.eq.s32.totalorder %s24, 0
      %p133 = por %p131, %p132
      %p134 = scmp.ne.s32.totalorder %s126, %s128
      %p135 = scmp.eq.s32.totalorder %s29, 3
      %p136 = por %p134, %p135
      %p137 = scmp.ne.s32.totalorder %s128, %s129
      %p138 = scmp.eq.s32.totalorder %s29, 0
      %p139 = por %p137, %p138
      %p140 = scmp.ne.s32.totalorder %s128, %s129
      %p141 = scmp.eq.s32.totalorder %s30, 3
      %p142 = por %p140, %p141
      %p144 = scmp.ne.s32.totalorder %s129, %s143
      %p145 = scmp.eq.s32.totalorder %s30, 0
      %p146 = por %p144, %p145
      %s148 = sadd.s32 %s147, 1
      %p151 = scmp.eq.s32.totalorder %s24, 3
      %p152 = scmp.ne.s32.totalorder %s147, %s149
      %p153 = scmp.eq.s32.totalorder %s24, 0
      %p154 = por %p152, %p153
      %p155 = scmp.ne.s32.totalorder %s147, %s149
      %p156 = scmp.eq.s32.totalorder %s29, 3
      %p157 = por %p155, %p156
      %p158 = scmp.ne.s32.totalorder %s149, %s150
      %p159 = scmp.eq.s32.totalorder %s29, 0
      %p160 = por %p158, %p159
      %p161 = scmp.ne.s32.totalorder %s149, %s150
      %p162 = scmp.eq.s32.totalorder %s30, 3
      %p163 = por %p161, %p162
      %p165 = scmp.ne.s32.totalorder %s150, %s164
      %p166 = scmp.eq.s32.totalorder %s30, 0
      %p167 = por %p165, %p166
      %s169 = sadd.s32 %s168, 1
      %p172 = scmp.eq.s32.totalorder %s24, 3
      %p173 = scmp.ne.s32.totalorder %s168, %s170
      %p174 = scmp.eq.s32.totalorder %s24, 0
      %p175 = por %p173, %p174
      %p176 = scmp.ne.s32.totalorder %s168, %s170
      %p177 = scmp.eq.s32.totalorder %s29, 3
      %p178 = por %p176, %p177
      %p179 = scmp.ne.s32.totalorder %s170, %s171
      %p180 = scmp.eq.s32.totalorder %s29, 0
      %p181 = por %p179, %p180
      %p182 = scmp.ne.s32.totalorder %s170, %s171
      %p183 = scmp.eq.s32.totalorder %s30, 3
      %p184 = por %p182, %p183
      %p186 = scmp.ne.s32.totalorder %s171, %s185
      %p187 = scmp.eq.s32.totalorder %s30, 0
      %p188 = por %p186, %p187
      %s190 = sadd.s32 %s189, 1
      %p193 = scmp.eq.s32.totalorder %s24, 3
      %p194 = scmp.ne.s32.totalorder %s189, %s191
      %p195 = scmp.eq.s32.totalorder %s24, 0
      %p196 = por %p194, %p195
      %p197 = scmp.ne.s32.totalorder %s189, %s191
      %p198 = scmp.eq.s32.totalorder %s29, 3
      %p199 = por %p197, %p198
      %p200 = scmp.ne.s32.totalorder %s191, %s192
      %p201 = scmp.eq.s32.totalorder %s29, 0
      %p202 = por %p200, %p201
      %p203 = scmp.ne.s32.totalorder %s191, %s192
      %p204 = scmp.eq.s32.totalorder %s30, 3
      %p205 = por %p203, %p204
      %p207 = scmp.ne.s32.totalorder %s192, %s206
      %p208 = scmp.eq.s32.totalorder %s30, 0
      %p209 = por %p207, %p208
      %s210 = ssub.s32 %s24, %s31
      %p211 = scmp.eq.s32.totalorder %s210, 0
      %s213 = sadd.s32 %s212, 1
      %s214 = scalar_select %p211, %s212, %s213
      %p217 = pneg %p211
      %p218 = scmp.eq.s32.totalorder %s24, 3
      %p219 = por %p217, %p218
      %p220 = scmp.ne.s32.totalorder %s212, %s215
      %p221 = scmp.eq.s32.totalorder %s24, 0
      %p222 = por %p220, %p221
      %p223 = scmp.ne.s32.totalorder %s212, %s215
      %p224 = scmp.eq.s32.totalorder %s29, 3
      %p225 = por %p223, %p224
      %p226 = scmp.ne.s32.totalorder %s215, %s216
      %p227 = scmp.eq.s32.totalorder %s29, 0
      %p228 = por %p226, %p227
      %p229 = scmp.ne.s32.totalorder %s215, %s216
      %p230 = scmp.eq.s32.totalorder %s30, 3
      %p231 = por %p229, %p230
      %p233 = scmp.ne.s32.totalorder %s216, %s232
      %p234 = scmp.eq.s32.totalorder %s30, 0
      %p235 = por %p233, %p234
      %p236 = scmp.le.s32.totalorder 1, %s24
      %p237 = scmp.lt.s32.totalorder %s24, 5
      %p238 = pnand %p236, %p237
      %p239 = pneg %p238
      // Predicated region
      $region9: #{tpu_custom_call.1} parent=5 // pred_check
        _
      $region10: #{tpu_custom_call.1} parent=5 // pred_check_branch
        %241 = sbr.rel (%p238) target = $region12
      $region11: #{tpu_custom_call.1} parent=5 // pred_region
        %s242 = ssub.s32 %s24, 1
        // Predicated region
        $region13: #{tpu_custom_call.1} parent=11 // pred_check
          %p243 = pneg %p97
        $region14: #{tpu_custom_call.1} parent=11 // pred_check_branch
          %245 = sbr.rel (%p243) target = $region16
        $region15: #{tpu_custom_call.1} parent=11 // pred_region
          %s247 = ssub.s32 256, 256
          %248 = vsyncadd [#allocation6], %s247
          %s249 = sshll.u32 [#allocation7], 4
          %s250 = int_to_ptr.vmem [resolvable:$true] %s249
          %255 = dma.hbm_to_vmem [thread:$0]  %s2, 256, %s250, [#allocation6], 64, 64, 4
        $region16: #{tpu_custom_call.1} parent=11 // pred_fallthru
          _
        // Predicated region
        $region17: #{tpu_custom_call.1} parent=11 // pred_check
          %p256 = pneg %p118
        $region18: #{tpu_custom_call.1} parent=11 // pred_check_branch
          %258 = sbr.rel (%p256) target = $region20
        $region19: #{tpu_custom_call.1} parent=11 // pred_region
          _
        $region20: #{tpu_custom_call.1} parent=11 // pred_fallthru
          _
        // Predicated region
        $region21: #{tpu_custom_call.1} parent=11 // pred_check
          %p259 = pneg %p139
        $region22: #{tpu_custom_call.1} parent=11 // pred_check_branch
          %261 = sbr.rel (%p259) target = $region24
        $region23: #{tpu_custom_call.1} parent=11 // pred_region
          %s263 = ssub.s32 256, 256
          %264 = vsyncadd [#allocation9], %s263
          %s265 = sshll.u32 [#allocation8], 4
          %s266 = int_to_ptr.vmem [resolvable:$true] %s265
          %271 = dma.hbm_to_vmem [thread:$0]  %s4, 256, %s266, [#allocation9], 64, 64, 4
        $region24: #{tpu_custom_call.1} parent=11 // pred_fallthru
          _
        // Predicated region
        $region25: #{tpu_custom_call.1} parent=11 // pred_check
          %p272 = pneg %p160
        $region26: #{tpu_custom_call.1} parent=11 // pred_check_branch
          %274 = sbr.rel (%p272) target = $region28
        $region27: #{tpu_custom_call.1} parent=11 // pred_region
          _
        $region28: #{tpu_custom_call.1} parent=11 // pred_fallthru
          _
        // Predicated region
        $region29: #{tpu_custom_call.1} parent=11 // pred_check
          %p275 = pneg %p181
        $region30: #{tpu_custom_call.1} parent=11 // pred_check_branch
          %277 = sbr.rel (%p275) target = $region32
        $region31: #{tpu_custom_call.1} parent=11 // pred_region
          _
        $region32: #{tpu_custom_call.1} parent=11 // pred_fallthru
          _
        // Predicated region
        $region33: #{tpu_custom_call.1} parent=11 // pred_check
          %p278 = pneg %p202
        $region34: #{tpu_custom_call.1} parent=11 // pred_check_branch
          %280 = sbr.rel (%p278) target = $region36
        $region35: #{tpu_custom_call.1} parent=11 // pred_region
          _
        $region36: #{tpu_custom_call.1} parent=11 // pred_fallthru
          _
      $region12: #{tpu_custom_call.1} parent=5 // pred_fallthru
        _
      %p281 = scmp.lt.s32.totalorder %s24, 4
      // Predicated region
      $region37: #{tpu_custom_call.1} parent=5 // pred_check
        %p282 = pneg %p281
      $region38: #{tpu_custom_call.1} parent=5 // pred_check_branch
        %284 = sbr.rel (%p282) target = $region40
      $region39: #{tpu_custom_call.1} parent=5 // pred_region
        // Predicated region
        $region41: #{tpu_custom_call.1} parent=39 // pred_check
          %p285 = pneg %p44
        $region42: #{tpu_custom_call.1} parent=39 // pred_check_branch
          %287 = sbr.rel (%p285) target = $region44
        $region43: #{tpu_custom_call.1} parent=39 // pred_region
          %s288 = sand.u32 %s34, 1
          %s289 = scalar_lea.sflag [#allocation3], %s288
          %s290 = sand.u32 %s34, 1
          %s291 = smul.addr %s290, 4
          %s292 = scalar_lea.vmem [#allocation2], %s291
          %s294 = ssub.s32 64, 64
          %295 = vsyncadd %s289, %s294
          %s296 = smul.addr %s24, 64
          %s297 = scalar_lea.hbm %s0, %s296
          %s299 = sshll.u32 %s292, 4
          %s300 = int_to_ptr.vmem [resolvable:$true] %s299
          %302 = dma.hbm_to_vmem [thread:$0]  %s297, 64, %s300, %s289
        $region44: #{tpu_custom_call.1} parent=39 // pred_fallthru
          _
        // Predicated region
        $region45: #{tpu_custom_call.1} parent=39 // pred_check
          %p303 = pneg %p70
        $region46: #{tpu_custom_call.1} parent=39 // pred_check_branch
          %305 = sbr.rel (%p303) target = $region48
        $region47: #{tpu_custom_call.1} parent=39 // pred_region
          %s306 = sand.u32 %s24, 1
          %s307 = scalar_lea.sflag [#allocation6], %s306
          %s308 = sand.u32 %s60, 1
          %s309 = smul.addr %s308, 4
          %s310 = scalar_lea.vmem [#allocation5], %s309
          %s312 = ssub.s32 64, 64
          %313 = vsyncadd %s307, %s312
          %s314 = smul.addr %s24, 64
          %s315 = scalar_lea.hbm %s1, %s314
          %s317 = sshll.u32 %s310, 4
          %s318 = int_to_ptr.vmem [resolvable:$true] %s317
          %320 = dma.hbm_to_vmem [thread:$0]  %s315, 64, %s318, %s307
        $region48: #{tpu_custom_call.1} parent=39 // pred_fallthru
          _
      $region40: #{tpu_custom_call.1} parent=5 // pred_fallthru
        _
      %p321 = scmp.le.s32.totalorder 1, %s24
      %p322 = scmp.lt.s32.totalorder %s24, 5
      %p323 = pnand %p321, %p322
      %p324 = pneg %p323
      // Predicated region
      $region49: #{tpu_custom_call.1} parent=5 // pred_check
        _
      $region50: #{tpu_custom_call.1} parent=5 // pred_check_branch
        %326 = sbr.rel (%p323) target = $region52
      $region51: #{tpu_custom_call.1} parent=5 // pred_region
        %s327 = ssub.s32 %s24, 1
        %s328 = sand.u32 %s37, 1
        %s329 = scalar_lea.sflag [#allocation3], %s328
        %s330 = sand.u32 %s37, 1
        %s331 = smul.addr %s330, 4
        %s332 = scalar_lea.vmem [#allocation2], %s331
        // Predicated region
        $region53: #{tpu_custom_call.1} parent=51 // pred_check
          %p333 = pneg %p50
        $region54: #{tpu_custom_call.1} parent=51 // pred_check_branch
          %335 = sbr.rel (%p333) target = $region56
        $region55: #{tpu_custom_call.1} parent=51 // pred_region
          %336 = dma.done %s329, 64
        $region56: #{tpu_custom_call.1} parent=51 // pred_fallthru
          _
        %s337 = sand.u32 %s29, 1
        %s338 = scalar_lea.sflag [#allocation6], %s337
        %s339 = sand.u32 %s63, 1
        %s340 = smul.addr %s339, 4
        %s341 = scalar_lea.vmem [#allocation5], %s340
        // Predicated region
        $region57: #{tpu_custom_call.1} parent=51 // pred_check
          %p342 = pneg %p76
        $region58: #{tpu_custom_call.1} parent=51 // pred_check_branch
          %344 = sbr.rel (%p342) target = $region60
        $region59: #{tpu_custom_call.1} parent=51 // pred_region
          %345 = dma.done %s338, 64
        $region60: #{tpu_custom_call.1} parent=51 // pred_fallthru
          _
        // Predicated region
        $region61: #{tpu_custom_call.1} parent=51 // pred_check
          %p346 = pneg %p97
        $region62: #{tpu_custom_call.1} parent=51 // pred_check_branch
          %348 = sbr.rel (%p346) target = $region64
        $region63: #{tpu_custom_call.1} parent=51 // pred_region
          %349 = dma.done [#allocation6], 256
        $region64: #{tpu_custom_call.1} parent=51 // pred_fallthru
          _
        // Predicated region
        $region65: #{tpu_custom_call.1} parent=51 // pred_check
          %p350 = pneg %p139
        $region66: #{tpu_custom_call.1} parent=51 // pred_check_branch
          %352 = sbr.rel (%p350) target = $region68
        $region67: #{tpu_custom_call.1} parent=51 // pred_region
          %353 = dma.done [#allocation9], 256
        $region68: #{tpu_custom_call.1} parent=51 // pred_fallthru
          _
        %s354 = sand.u32 %s37, 1
        %s355 = scalar_lea.sflag [#allocation3], %s354
        %s356 = sand.u32 %s37, 1
        %s357 = smul.addr %s356, 4
        %s358 = scalar_lea.vmem [#allocation2], %s357
        %p359 = pneg %p50
        %p360 = pneg %p47
        %s361 = sand.u32 %s29, 1
        %s362 = scalar_lea.sflag [#allocation6], %s361
        %s363 = sand.u32 %s63, 1
        %s364 = smul.addr %s363, 4
        %s365 = scalar_lea.vmem [#allocation5], %s364
        %p366 = pneg %p76
        %p367 = pneg %p73
        %p368 = pneg %p97
        %p369 = pneg %p94
        %p370 = pneg %p118
        %p371 = pneg %p115
        %p372 = pneg %p139
        %p373 = pneg %p136
        %p374 = pneg %p160
        %p375 = pneg %p157
        %p376 = pneg %p181
        %p377 = pneg %p178
        %p378 = pneg %p202
        %p379 = pneg %p199
        %p380 = pneg %p228
        %p381 = pneg %p225
        %s382 = sand.u32 %s215, 1
        %s383 = scalar_lea.sflag [#allocation4], %s382
        %s384 = sand.u32 %s215, 1
        %s385 = smul.addr %s384, 8
        %s386 = scalar_lea.vmem [#allocation10], %s385
        %v388 = vld [vmem:[%s332] sm:$0xf]
        %v389 = vld [vmem:[%s341] sm:$0xf]
        %v390 = vld [vmem:[#allocation7] sm:$0xf]
        %v391 = vld [vmem:[#allocation7 + $0x4] sm:$0xf]
        %v392 = vld [vmem:[#allocation7 + $0x8] sm:$0xf]
        %v393 = vld [vmem:[#allocation7 + $0xc] sm:$0xf]
        %v394 = vld [vmem:[%s3] sm:$0x1]
        %v396 = vlaneseq
        %v397 = vshrl.u32 %v396, 7
        %v398 = vsub.s32 0, %v397
        %v399 = vrot.slane %v394, %v398
        %v405 = vunpack.c.l.b16 %v390
        %v406 = vunpack.c.l.b16 %v391
        %v407 = vunpack.c.l.b16 %v392
        %v408 = vunpack.c.l.b16 %v393
        %v409 = vpack.c.b16 %v406, %v405
        %v410 = vpack.c.b16 %v408, %v407
        %vm413 = vcmask 261120
        %v415 = vsel %vm413, %v388, 0
        %417 = vmatprep.subr.bf16.mxu0 0
        %418 = vmatpush1.bf16.msra.mxu0 %v409
        %419 = vmatprep.subr.bf16.mxu0 0
        %420 = vmatpush1.bf16.msra.mxu0 %v410
        %421 = vmatprep.subr.bf16.mxu0 0
        %422 = vmatpush1.bf16.msra.mxu0 0
        %423 = vmatprep.subr.bf16.mxu0 0
        %424 = vmatpush1.bf16.msra.mxu0 0
        %425 = vmatprep.subr.bf16.mxu0 0
        %426 = vmatpush1.bf16.msra.mxu0 0
        %427 = vmatprep.subr.bf16.mxu0 0
        %428 = vmatpush1.bf16.msra.mxu0 0
        %429 = vmatprep.subr.bf16.mxu0 0
        %430 = vmatpush1.bf16.msra.mxu0 0
        %431 = vmatprep.subr.bf16.mxu0 0
        %432 = vmatpush1.bf16.msra.mxu0 0
        %433 = vmatprep.subr.bf16.mxu0 0
        %434 = vmatpush1.bf16.msra.mxu0 0
        %435 = vmatprep.subr.bf16.mxu0 0
        %436 = vmatpush1.bf16.msra.mxu0 0
        %437 = vmatprep.subr.bf16.mxu0 0
        %438 = vmatpush1.bf16.msra.mxu0 0
        %439 = vmatprep.subr.bf16.mxu0 0
        %440 = vmatpush1.bf16.msra.mxu0 0
        %441 = vmatprep.subr.bf16.mxu0 0
        %442 = vmatpush1.bf16.msra.mxu0 0
        %443 = vmatprep.subr.bf16.mxu0 0
        %444 = vmatpush1.bf16.msra.mxu0 0
        %445 = vmatprep.subr.bf16.mxu0 0
        %446 = vmatpush1.bf16.msra.mxu0 0
        %447 = vmatprep.subr.bf16.mxu0 0
        %448 = vmatpush1.bf16.msra.mxu0 0
        %449 = vmatprep.mubr.bf16.mxu0 0
        %450 = vmatmul.mubr.bf16.gmra.mrb[0].mxu0 %v415
        %v451 = vpop.f32.mrb[0].mxu0
        %v452 = vadd.f32 %v399, %v451
        %v453 = vpop.f32.mrb[0].mxu0
        %v454 = vpop.f32.mrb[0].mxu0
        %v455 = vpop.f32.mrb[0].mxu0
        %456 = vdwg.mxu0
        %v457 = vld [vmem:[#allocation8] sm:$0xf]
        %v458 = vld [vmem:[#allocation8 + $0x4] sm:$0xf]
        %v459 = vld [vmem:[#allocation8 + $0x8] sm:$0xf]
        %v460 = vld [vmem:[#allocation8 + $0xc] sm:$0xf]
        %v461 = vld [vmem:[%s5] sm:$0x1]
        %v463 = vlaneseq
        %v464 = vshrl.u32 %v463, 7
        %v465 = vsub.s32 0, %v464
        %v466 = vrot.slane %v461, %v465
        %v472 = vunpack.c.l.b16 %v457
        %v473 = vunpack.c.l.b16 %v458
        %v474 = vunpack.c.l.b16 %v459
        %v475 = vunpack.c.l.b16 %v460
        %v476 = vpack.c.b16 %v473, %v472
        %v477 = vpack.c.b16 %v475, %v474
        %v481 = vsel %vm413, %v389, 0
        %483 = vmatprep.subr.bf16.mxu0 0
        %484 = vmatpush1.bf16.msra.mxu0 %v476
        %485 = vmatprep.subr.bf16.mxu0 0
        %486 = vmatpush1.bf16.msra.mxu0 %v477
        %487 = vmatprep.subr.bf16.mxu0 0
        %488 = vmatpush1.bf16.msra.mxu0 0
        %489 = vmatprep.subr.bf16.mxu0 0
        %490 = vmatpush1.bf16.msra.mxu0 0
        %491 = vmatprep.subr.bf16.mxu0 0
        %492 = vmatpush1.bf16.msra.mxu0 0
        %493 = vmatprep.subr.bf16.mxu0 0
        %494 = vmatpush1.bf16.msra.mxu0 0
        %495 = vmatprep.subr.bf16.mxu0 0
        %496 = vmatpush1.bf16.msra.mxu0 0
        %497 = vmatprep.subr.bf16.mxu0 0
        %498 = vmatpush1.bf16.msra.mxu0 0
        %499 = vmatprep.subr.bf16.mxu0 0
        %500 = vmatpush1.bf16.msra.mxu0 0
        %501 = vmatprep.subr.bf16.mxu0 0
        %502 = vmatpush1.bf16.msra.mxu0 0
        %503 = vmatprep.subr.bf16.mxu0 0
        %504 = vmatpush1.bf16.msra.mxu0 0
        %505 = vmatprep.subr.bf16.mxu0 0
        %506 = vmatpush1.bf16.msra.mxu0 0
        %507 = vmatprep.subr.bf16.mxu0 0
        %508 = vmatpush1.bf16.msra.mxu0 0
        %509 = vmatprep.subr.bf16.mxu0 0
        %510 = vmatpush1.bf16.msra.mxu0 0
        %511 = vmatprep.subr.bf16.mxu0 0
        %512 = vmatpush1.bf16.msra.mxu0 0
        %513 = vmatprep.subr.bf16.mxu0 0
        %514 = vmatpush1.bf16.msra.mxu0 0
        %515 = vmatprep.mubr.bf16.mxu0 0
        %516 = vmatmul.mubr.bf16.gmra.mrb[0].mxu0 %v481
        %v517 = vpop.f32.mrb[0].mxu0
        %v518 = vadd.f32 %v466, %v517
        %v519 = vpop.f32.mrb[0].mxu0
        %v520 = vpop.f32.mrb[0].mxu0
        %v521 = vpop.f32.mrb[0].mxu0
        %522 = vdwg.mxu0
        %v523 = vld [vmem:[%s6] sm:$0xf]
        %v524 = vld [vmem:[%s6 + $0x4] sm:$0xf]
        %v525 = vld [vmem:[%s6 + $0x8] sm:$0xf]
        %v526 = vld [vmem:[%s6 + $0xc] sm:$0xf]
        %v527 = vld [vmem:[%s7] sm:$0x1]
        %v529 = vlaneseq
        %v530 = vshrl.u32 %v529, 7
        %v531 = vsub.s32 0, %v530
        %v532 = vrot.slane %v527, %v531
        %v538 = vunpack.c.l.b16 %v523
        %v539 = vunpack.c.l.b16 %v524
        %v540 = vunpack.c.l.b16 %v525
        %v541 = vunpack.c.l.b16 %v526
        %v542 = vpack.c.b16 %v539, %v538
        %v543 = vpack.c.b16 %v541, %v540
        %546 = vmatprep.subr.bf16.mxu0 0
        %547 = vmatpush1.bf16.msra.mxu0 %v542
        %548 = vmatprep.subr.bf16.mxu0 0
        %549 = vmatpush1.bf16.msra.mxu0 %v543
        %550 = vmatprep.subr.bf16.mxu0 0
        %551 = vmatpush1.bf16.msra.mxu0 0
        %552 = vmatprep.subr.bf16.mxu0 0
        %553 = vmatpush1.bf16.msra.mxu0 0
        %554 = vmatprep.subr.bf16.mxu0 0
        %555 = vmatpush1.bf16.msra.mxu0 0
        %556 = vmatprep.subr.bf16.mxu0 0
        %557 = vmatpush1.bf16.msra.mxu0 0
        %558 = vmatprep.subr.bf16.mxu0 0
        %559 = vmatpush1.bf16.msra.mxu0 0
        %560 = vmatprep.subr.bf16.mxu0 0
        %561 = vmatpush1.bf16.msra.mxu0 0
        %562 = vmatprep.subr.bf16.mxu0 0
        %563 = vmatpush1.bf16.msra.mxu0 0
        %564 = vmatprep.subr.bf16.mxu0 0
        %565 = vmatpush1.bf16.msra.mxu0 0
        %566 = vmatprep.subr.bf16.mxu0 0
        %567 = vmatpush1.bf16.msra.mxu0 0
        %568 = vmatprep.subr.bf16.mxu0 0
        %569 = vmatpush1.bf16.msra.mxu0 0
        %570 = vmatprep.subr.bf16.mxu0 0
        %571 = vmatpush1.bf16.msra.mxu0 0
        %572 = vmatprep.subr.bf16.mxu0 0
        %573 = vmatpush1.bf16.msra.mxu0 0
        %574 = vmatprep.subr.bf16.mxu0 0
        %575 = vmatpush1.bf16.msra.mxu0 0
        %576 = vmatprep.subr.bf16.mxu0 0
        %577 = vmatpush1.bf16.msra.mxu0 0
        %578 = vmatprep.mubr.bf16.mxu0 0
        %579 = vmatmul.mubr.bf16.gmra.mrb[0].mxu0 %v481
        %v580 = vpop.f32.mrb[0].mxu0
        %v581 = vadd.f32 %v532, %v580
        %v582 = vpop.f32.mrb[0].mxu0
        %v583 = vpop.f32.mrb[0].mxu0
        %v584 = vpop.f32.mrb[0].mxu0
        %585 = vdwg.mxu0
        %v586 = vpack.c.bf16 %v452, %v452
        %v587 = vpack.c.bf16 %v518, %v518
        %v588 = vpack.c.bf16 %v581, %v581
        %589 = vmatprep.subr.bf16.mxu0 0
        %590 = vmatpush1.bf16.xpose.msra.mxu0 %v587
        %591 = vmatprep.subr.bf16.mxu0 0
        %592 = vmatpush1.bf16.xpose.msra.mxu0 0
        %593 = vmatprep.subr.bf16.mxu0 0
        %594 = vmatpush1.bf16.xpose.msra.mxu0 0
        %595 = vmatprep.subr.bf16.mxu0 0
        %596 = vmatpush1.bf16.xpose.msra.mxu0 0
        %597 = vmatprep.subr.bf16.mxu0 0
        %598 = vmatpush1.bf16.xpose.msra.mxu0 0
        %599 = vmatprep.subr.bf16.mxu0 0
        %600 = vmatpush1.bf16.xpose.msra.mxu0 0
        %601 = vmatprep.subr.bf16.mxu0 0
        %602 = vmatpush1.bf16.xpose.msra.mxu0 0
        %603 = vmatprep.subr.bf16.mxu0 0
        %604 = vmatpush1.bf16.xpose.msra.mxu0 0
        %605 = vmatprep.subr.bf16.mxu0 0
        %606 = vmatpush1.bf16.xpose.msra.mxu0 0
        %607 = vmatprep.subr.bf16.mxu0 0
        %608 = vmatpush1.bf16.xpose.msra.mxu0 0
        %609 = vmatprep.subr.bf16.mxu0 0
        %610 = vmatpush1.bf16.xpose.msra.mxu0 0
        %611 = vmatprep.subr.bf16.mxu0 0
        %612 = vmatpush1.bf16.xpose.msra.mxu0 0
        %613 = vmatprep.subr.bf16.mxu0 0
        %614 = vmatpush1.bf16.xpose.msra.mxu0 0
        %615 = vmatprep.subr.bf16.mxu0 0
        %616 = vmatpush1.bf16.xpose.msra.mxu0 0
        %617 = vmatprep.subr.bf16.mxu0 0
        %618 = vmatpush1.bf16.xpose.msra.mxu0 0
        %619 = vmatprep.subr.bf16.mxu0 0
        %620 = vmatpush1.bf16.xpose.msra.mxu0 0
        %621 = vmatprep.mubr.bf16.mxu0 0
        %622 = vmatmul.mubr.bf16.gmra.mrb[0].mxu0 %v586
        %v623 = vpop.f32.mrb[0].mxu0
        %v624 = vadd.f32 0.0, %v623
        %v625 = vpop.f32.mrb[0].mxu0
        %v626 = vpop.f32.mrb[0].mxu0
        %v627 = vpop.f32.mrb[0].mxu0
        %628 = vdwg.mxu0
        %vm629 = vcmask 64512
        %v630 = vsel %vm629, %v624, -inf
        %631 = vmax.xlane.f32.xlu0 %v630
        %v632 = vpop.xlane.xlu0 %631
        %v633 = vsub.f32 %v624, %v632
        %v634 = vmul.f32 %v633, 1.442695
        %v635 = vpow.pop %v634
        %v636 = vsel %vm629, %v635, 0.0
        %637 = vadd.xlane.f32.xlu0 %v636
        %v638 = vpop.xlane.xlu0 %637
        %v639 = vrcp.pop %v638
        %v640 = vmul.f32 %v635, %v639
        %v641 = vpack.c.bf16 %v640, %v640
        %v643 = vsel %vm629, %v641, 0
        %vm645 = vcmask 1043456
        %v647 = vsel %vm645, %v588, 0
        %649 = vmatprep.subr.bf16.mxu0 0
        %650 = vmatpush1.bf16.msra.mxu0 %v647
        %651 = vmatprep.subr.bf16.mxu0 0
        %652 = vmatpush1.bf16.msra.mxu0 0
        %653 = vmatprep.subr.bf16.mxu0 0
        %654 = vmatpush1.bf16.msra.mxu0 0
        %655 = vmatprep.subr.bf16.mxu0 0
        %656 = vmatpush1.bf16.msra.mxu0 0
        %657 = vmatprep.subr.bf16.mxu0 0
        %658 = vmatpush1.bf16.msra.mxu0 0
        %659 = vmatprep.subr.bf16.mxu0 0
        %660 = vmatpush1.bf16.msra.mxu0 0
        %661 = vmatprep.subr.bf16.mxu0 0
        %662 = vmatpush1.bf16.msra.mxu0 0
        %663 = vmatprep.subr.bf16.mxu0 0
        %664 = vmatpush1.bf16.msra.mxu0 0
        %665 = vmatprep.subr.bf16.mxu0 0
        %666 = vmatpush1.bf16.msra.mxu0 0
        %667 = vmatprep.subr.bf16.mxu0 0
        %668 = vmatpush1.bf16.msra.mxu0 0
        %669 = vmatprep.subr.bf16.mxu0 0
        %670 = vmatpush1.bf16.msra.mxu0 0
        %671 = vmatprep.subr.bf16.mxu0 0
        %672 = vmatpush1.bf16.msra.mxu0 0
        %673 = vmatprep.subr.bf16.mxu0 0
        %674 = vmatpush1.bf16.msra.mxu0 0
        %675 = vmatprep.subr.bf16.mxu0 0
        %676 = vmatpush1.bf16.msra.mxu0 0
        %677 = vmatprep.subr.bf16.mxu0 0
        %678 = vmatpush1.bf16.msra.mxu0 0
        %679 = vmatprep.subr.bf16.mxu0 0
        %680 = vmatpush1.bf16.msra.mxu0 0
        %681 = vmatprep.mubr.bf16.mxu0 0
        %682 = vmatmul.mubr.bf16.gmra.mrb[0].mxu0 %v643
        %v683 = vpop.f32.mrb[0].mxu0
        %v684 = vadd.f32 0.0, %v683
        %v685 = vpop.f32.mrb[0].mxu0
        %v686 = vpop.f32.mrb[0].mxu0
        %v687 = vpop.f32.mrb[0].mxu0
        %688 = vdwg.mxu0
        %689 = vst [vmem:[%s386] sm:$0xff] %v684
        %s690 = sand.u32 %s215, 1
        %s691 = scalar_lea.sflag [#allocation4], %s690
        %s692 = sand.u32 %s215, 1
        %s693 = smul.addr %s692, 8
        %s694 = scalar_lea.vmem [#allocation10], %s693
        // Predicated region
        $region69: #{tpu_custom_call.1} parent=51 // pred_check
          %p695 = pneg %p225
        $region70: #{tpu_custom_call.1} parent=51 // pred_check_branch
          %697 = sbr.rel (%p695) target = $region72
        $region71: #{tpu_custom_call.1} parent=51 // pred_region
          %s699 = ssub.s32 128, 128
          %700 = vsyncadd %s691, %s699
          %s701 = smul.addr %s29, 128
          %s702 = scalar_lea.hbm %s8, %s701
          %s704 = sshll.u32 %s694, 4
          %s705 = int_to_ptr.vmem [resolvable:$true] %s704
          %707 = dma.vmem_to_hbm [thread:$0]  %s705, 128, %s702, %s691
        $region72: #{tpu_custom_call.1} parent=51 // pred_fallthru
          _
      $region52: #{tpu_custom_call.1} parent=5 // pred_fallthru
        _
      %p708 = scmp.le.s32.totalorder 2, %s24
      // Predicated region
      $region73: #{tpu_custom_call.1} parent=5 // pred_check
        %p709 = pneg %p708
      $region74: #{tpu_custom_call.1} parent=5 // pred_check_branch
        %711 = sbr.rel (%p709) target = $region76
      $region75: #{tpu_custom_call.1} parent=5 // pred_region
        %s712 = ssub.s32 %s24, 2
        // Predicated region
        $region77: #{tpu_custom_call.1} parent=75 // pred_check
          %p713 = pneg %p231
        $region78: #{tpu_custom_call.1} parent=75 // pred_check_branch
          %715 = sbr.rel (%p713) target = $region80
        $region79: #{tpu_custom_call.1} parent=75 // pred_region
          %s716 = sand.u32 %s216, 1
          %s717 = scalar_lea.sflag [#allocation4], %s716
          %s718 = sand.u32 %s216, 1
          %s719 = smul.addr %s718, 8
          %s720 = scalar_lea.vmem [#allocation10], %s719
          %721 = dma.done %s717, 128
        $region80: #{tpu_custom_call.1} parent=75 // pred_fallthru
          _
      $region76: #{tpu_custom_call.1} parent=5 // pred_fallthru
        _
    $region6: #{tpu_custom_call.1} parent=1 // loop_footer
      %s28 = sadd.s32 1, %s24
    $region7: #{tpu_custom_call.1} parent=1 // loop_footer_branch
      %23 = sbr.rel target = $region3
    $region8: #{tpu_custom_call.1} parent=1 // loop_exit
      _
    %722 = vsyncpa [#allocation3], 1
    %s723 = scalar_lea.sflag [#allocation3], 1
    %724 = vsyncpa %s723, 1
    %725 = vsyncpa [#allocation6], 1
    %s726 = scalar_lea.sflag [#allocation6], 1
    %727 = vsyncpa %s726, 1
    %728 = vsyncpa [#allocation9], 1
    %729 = vsyncpa [#allocation4], 1
    %s730 = scalar_lea.sflag [#allocation4], 1
    %731 = vsyncpa %s730, 1

</llo_original>
